<compile_context>
chip_gen: v7x
topology: tpu7x:2x2x1
jax: 0.10.0
libtpu: 0.0.40
codegen_flags: <defaults>
</compile_context>

<pallas_src>
import functools

import jax
import jax.numpy as jnp
from jax.experimental import pallas as pl
from jax.experimental.pallas import tpu as pltpu

_MIB = 1024 * 1024
_PLAN_SLACK = 2 * _MIB   # headroom for Mosaic-internal scratch / semaphores


def _round_up(x, m):
    return (x + m - 1) // m * m


def _residual_linear_kernel(x_ref, w_ref, b_ref, o_ref, *, compute_dtype):
    """Full-K tile: out = x @ W + b + x for one (tm, tn) output block."""
    tn = o_ref.shape[-1]
    j = pl.program_id(0)                           # hidden_out (N) block index

    x = x_ref[...]                                 # (tm, K) full-K LHS tile
    y = jnp.dot(x.astype(compute_dtype), w_ref[...].astype(compute_dtype),
                preferred_element_type=jnp.float32)

    # Residual: the matching column window of the (full-K) LHS tile, added in
    # the input dtype's precision (not the bf16 compute dtype).
    col = pl.multiple_of(j * tn, tn)
    res = x_ref[:, pl.ds(col, tn)].astype(jnp.float32)

    o_ref[...] = (y + b_ref[...].astype(jnp.float32) + res).astype(o_ref.dtype)


def _residual_linear_ksplit_kernel(x_ref, w_ref, b_ref, r_ref, o_ref, acc_ref,
                                   *, compute_dtype):
    """K-split tile: f32 accumulator over the K grid axis (last, arbitrary)."""
    k = pl.program_id(2)

    @pl.when(k == 0)
    def _init():
        acc_ref[...] = jnp.zeros_like(acc_ref)

    acc_ref[...] += jnp.dot(x_ref[...].astype(compute_dtype),
                            w_ref[...].astype(compute_dtype),
                            preferred_element_type=jnp.float32)

    @pl.when(k == pl.num_programs(2) - 1)
    def _finalize():
        o_ref[...] = (acc_ref[...]
                      + b_ref[...].astype(jnp.float32)
                      + r_ref[...].astype(jnp.float32)).astype(o_ref.dtype)


def _default_vmem_budget_bytes():
    """Generation-aware tile budget: ~3/4 of physical VMEM, never below 32 MiB."""
    phys = None
    try:
        info = pltpu.get_tpu_info()
        for name in ("vmem_capacity_bytes", "vmem_size_bytes", "vmem_bytes"):
            phys = getattr(info, name, None)
            if phys:
                break
    except Exception:
        phys = None
    if not phys or int(phys) < 8 * _MIB:
        phys = 64 * _MIB                # conservative fallback: v7x per-core VMEM
    phys = int(phys)
    return max(32 * _MIB, min(phys * 3 // 4, phys - 16 * _MIB))


def residual_linear(x, w, b, *, compute_dtype=jnp.bfloat16, tm=512,
                    tn=None, tk=None, force_k_split=False,
                    vmem_budget_bytes=None):
    """Residual(Linear): y = x @ w + b + x, fused in a single Pallas kernel.

    x: (batch, seq, hidden); w: (hidden, hidden); b: (hidden,).
    compute_dtype: dtype fed to the MXU (default bf16; pass jnp.float32 / None
      for exact input-precision matmul).  Accumulation is always f32.
    tn / tk / force_k_split: optional manual tile overrides (testing / tuning).
    """
    batch, seq, hidden = x.shape
    n_tok = batch * seq
    in_bytes = jnp.dtype(x.dtype).itemsize
    out_bytes = in_bytes
    if compute_dtype is None:
        compute_dtype = x.dtype
    compute_dtype = jnp.dtype(compute_dtype)

    budget = (vmem_budget_bytes if vmem_budget_bytes is not None
              else _default_vmem_budget_bytes())
    vmem_limit = max(budget, 32 * _MIB)

    # Lane-dense hidden: pad to a multiple of 128 only when needed (avoids
    # masked vst.msk stores and un-tileable (H, H) W blocks for odd H).
    hidden_p = _round_up(hidden, 128)

    # Token tile: dtype-aware sublane packing (8 f32 / 16 bf16 / 32 int8), and
    # prefer a tile that divides the lightly rounded token count (no host pad).
    sub = max(8, 32 // in_bytes)
    n_tok_r = _round_up(n_tok, sub)
    tm_cap = max(sub, (min(tm, n_tok_r) // sub) * sub)
    tm_eff = 0
    t = tm_cap
    while t >= sub:
        if n_tok_r % t == 0:
            tm_eff = t
            break
        t -= sub
    if tm_eff < max(sub, tm_cap // 2):
        tm_eff = tm_cap                 # accept a small pad, keep big tiles

    # Lane-dense N/K tile candidates: divisors of hidden_p that are multiples
    # of 128 (hidden_p first -> W read once and x streamed exactly once).
    candidates = [d for d in range(hidden_p, 127, -128) if hidden_p % d == 0]

    def fullk_bytes(tn_):
        return (2 * tm_eff * hidden_p * in_bytes      # x blocks (dbl-buffered)
                + 2 * hidden_p * tn_ * in_bytes       # W column slab
                + 2 * tn_ * in_bytes                  # bias
                + 2 * tm_eff * tn_ * out_bytes)       # output blocks

    def ksplit_bytes(tn_, tk_):
        return (2 * tm_eff * tk_ * in_bytes           # x K-blocks
                + 2 * tk_ * tn_ * in_bytes            # W blocks
                + 2 * tn_ * in_bytes                  # bias
                + 2 * tm_eff * tn_ * in_bytes         # residual blocks
                + 2 * tm_eff * tn_ * out_bytes        # output blocks
                + tm_eff * tn_ * 4)                   # f32 accumulator scratch

    if tn is not None:
        if hidden_p % tn != 0 or (tn % 128 != 0 and tn != hidden_p):
            raise ValueError(f"tn={tn} must divide padded hidden={hidden_p} "
                             "and be a multiple of 128")
        if force_k_split:
            tk_over = hidden_p if tk is None else tk
            if hidden_p % tk_over != 0:
                raise ValueError(f"tk={tk_over} must divide padded hidden={hidden_p}")
            plan = ("ksplit", tn, tk_over)
        else:
            plan = ("fullk", tn, hidden_p)
    else:
        plan = None
        while plan is None:
            if not force_k_split:
                for tn_ in candidates:
                    if fullk_bytes(tn_) + _PLAN_SLACK <= budget:
                        plan = ("fullk", tn_, hidden_p)
                        break
            if plan is None:
                for tn_ in candidates:
                    for tk_ in candidates:
                        if ksplit_bytes(tn_, tk_) + _PLAN_SLACK <= budget:
                            plan = ("ksplit", tn_, tk_)
                            break
                    if plan is not None:
                        break
            if plan is None:
                if tm_eff <= sub:
                    raise ValueError(
                        "residual_linear: no tile plan fits the VMEM budget "
                        f"(hidden={hidden_p}, budget={budget} bytes)")
                tm_eff = max(sub, ((tm_eff // 2) // sub) * sub)

    kind, tn_eff, tk_eff = plan
    n_tok_p = _round_up(n_tok_r, tm_eff)

    # Host-side padding only when strictly required.
    x2d = x.reshape(n_tok, hidden)
    pad_rows = n_tok_p - n_tok
    pad_cols = hidden_p - hidden
    if pad_rows or pad_cols:
        x2d = jnp.pad(x2d, ((0, pad_rows), (0, pad_cols)))
    w_p = jnp.pad(w, ((0, pad_cols), (0, pad_cols))) if pad_cols else w
    b_p = jnp.pad(b, ((0, pad_cols),)) if pad_cols else b
    b2d = b_p.reshape(1, hidden_p)

    nj = hidden_p // tn_eff
    ni = n_tok_p // tm_eff
    flops = 2 * n_tok_p * hidden_p * hidden_p

    if kind == "fullk":
        kernel = functools.partial(_residual_linear_kernel,
                                   compute_dtype=compute_dtype)
        cost = pl.CostEstimate(
            flops=flops, transcendentals=0,
            bytes_accessed=(nj * x2d.size + w_p.size + b2d.size
                            + n_tok_p * hidden_p) * in_bytes)
        grid_spec = pltpu.PrefetchScalarGridSpec(
            num_scalar_prefetch=0,
            grid=(nj, ni),                          # N outer, tokens inner
            in_specs=[
                # x: (tm, K) full-K tile; block index changes only with tokens.
                pl.BlockSpec((tm_eff, hidden_p), lambda j, i: (i, 0)),
                # W: (K, tn) column slab; constant across the inner token axis
                # -> DMA'd once per N block and reused.
                pl.BlockSpec((hidden_p, tn_eff), lambda j, i: (0, j)),
                # b: (1, tn) bias slice for this N block.
                pl.BlockSpec((1, tn_eff), lambda j, i: (0, j)),
            ],
            out_specs=pl.BlockSpec((tm_eff, tn_eff), lambda j, i: (i, j)),
        )
        dim_sem = ("parallel", "parallel")
        operands = (x2d, w_p, b2d)
    else:
        nk = hidden_p // tk_eff
        kernel = functools.partial(_residual_linear_ksplit_kernel,
                                   compute_dtype=compute_dtype)
        cost = pl.CostEstimate(
            flops=flops, transcendentals=0,
            bytes_accessed=(nj * x2d.size + ni * w_p.size + b2d.size
                            + x2d.size + n_tok_p * hidden_p) * in_bytes)
        grid_spec = pltpu.PrefetchScalarGridSpec(
            num_scalar_prefetch=0,
            grid=(nj, ni, nk),                      # K innermost (reduction)
            in_specs=[
                pl.BlockSpec((tm_eff, tk_eff), lambda j, i, k: (i, k)),   # x
                pl.BlockSpec((tk_eff, tn_eff), lambda j, i, k: (k, j)),   # W
                pl.BlockSpec((1, tn_eff), lambda j, i, k: (0, j)),        # bias
                # Residual: dedicated (tm, tn) stream of x (NOT a slice of the
                # K-partial LHS tile); constant across k -> fetched once/block.
                pl.BlockSpec((tm_eff, tn_eff), lambda j, i, k: (i, j)),
            ],
            out_specs=pl.BlockSpec((tm_eff, tn_eff), lambda j, i, k: (i, j)),
            scratch_shapes=[pltpu.VMEM((tm_eff, tn_eff), jnp.float32)],
        )
        dim_sem = ("parallel", "parallel", "arbitrary")
        operands = (x2d, w_p, b2d, x2d)

    out2d = pl.pallas_call(
        kernel,
        out_shape=jax.ShapeDtypeStruct((n_tok_p, hidden_p), x.dtype),
        grid_spec=grid_spec,
        compiler_params=pltpu.CompilerParams(
            dimension_semantics=dim_sem,
            vmem_limit_bytes=vmem_limit,
        ),
        cost_estimate=cost,
    )(*operands)

    return out2d[:n_tok, :hidden].reshape(batch, seq, hidden)


if __name__ == "__main__":
    key = jax.random.PRNGKey(0)

    # --- Small shape implied by the module (batch=2, seq=8, hidden=32).
    batch, seq, hidden = 2, 8, 32
    kx, kw, kb = jax.random.split(key, 3)
    x = jax.random.normal(kx, (batch, seq, hidden), dtype=jnp.float32)
    w = jax.random.normal(kw, (hidden, hidden), dtype=jnp.float32) * 0.02
    b = jax.random.normal(kb, (hidden,), dtype=jnp.float32) * 0.01
    ref = jnp.einsum("bsh,hk->bsk", x, w) + b + x

    # 1) exact-f32 path (also exercises hidden padding 32 -> 128).
    out = jax.block_until_ready(
        residual_linear(x, w, b, compute_dtype=jnp.float32))
    assert jnp.allclose(out, ref, atol=1e-5, rtol=1e-5), "f32 exact mismatch"

    # 2) default path: f32 inputs, bf16-fed MXU, f32 epilogue / residual.
    out_bf = jax.block_until_ready(residual_linear(x, w, b))
    assert jnp.allclose(out_bf, ref, atol=5e-2, rtol=5e-2), "bf16-compute mismatch"

    # 3) bf16 inputs end-to-end.
    out_b16 = jax.block_until_ready(
        residual_linear(x.astype(jnp.bfloat16), w.astype(jnp.bfloat16),
                        b.astype(jnp.bfloat16)))
    assert jnp.allclose(out_b16.astype(jnp.float32), ref,
                        atol=5e-2, rtol=5e-2), "bf16-input mismatch"

    # --- Larger shape exercising a real tiled grid.
    batch2, seq2, hidden2 = 2, 256, 256
    kx2, kw2, kb2 = jax.random.split(jax.random.PRNGKey(1), 3)
    x2 = jax.random.normal(kx2, (batch2, seq2, hidden2), dtype=jnp.float32)
    w2 = jax.random.normal(kw2, (hidden2, hidden2), dtype=jnp.float32) * 0.02
    b2 = jax.random.normal(kb2, (hidden2,), dtype=jnp.float32) * 0.01
    ref2 = jnp.einsum("bsh,hk->bsk", x2, w2) + b2 + x2

    # 4) full-K kernel with tn < hidden (in-kernel residual column slice).
    out2 = jax.block_until_ready(
        residual_linear(x2, w2, b2, compute_dtype=jnp.float32, tm=128, tn=128))
    assert jnp.allclose(out2, ref2, atol=1e-2, rtol=1e-2), "tiled full-K mismatch"

    # 5) K-split kernel (f32 VMEM accumulator + dedicated residual stream).
    out3 = jax.block_until_ready(
        residual_linear(x2, w2, b2, compute_dtype=jnp.float32, tm=128,
                        tn=128, tk=128, force_k_split=True))
    assert jnp.allclose(out3, ref2, atol=1e-2, rtol=1e-2), "K-split mismatch"

    print("KERNEL_OK")
</pallas_src>

<mosaic_0001>
module attributes {stable_mosaic.version = 11 : i64} {
  func.func @_residual_linear_kernel(%arg0: i32, %arg1: i32, %arg2: memref<16x128xf32, #tpu.memory_space<vmem>>, %arg3: memref<128x128xf32, #tpu.memory_space<vmem>>, %arg4: memref<1x128xf32, #tpu.memory_space<vmem>>, %arg5: memref<16x128xf32, #tpu.memory_space<vmem>>) attributes {dimension_semantics = [#tpu.dimension_semantics<parallel>, #tpu.dimension_semantics<parallel>], iteration_bounds = array<i64: 1, 1>, scalar_prefetch = 0 : i64, scratch_operands = 0 : i64, tpu.core_type = #tpu.core_type<tc>, window_params = [{transform_indices = @transform_0, window_bounds = array<i64: 16, 128>}, {transform_indices = @transform_1, window_bounds = array<i64: 128, 128>}, {transform_indices = @transform_2, window_bounds = array<i64: 1, 128>}, {transform_indices = @transform_3, window_bounds = array<i64: 16, 128>}]} {
    %c0 = arith.constant 0 : index
    %c0_0 = arith.constant 0 : index
    %0 = vector.load %arg2[%c0, %c0_0] : memref<16x128xf32, #tpu.memory_space<vmem>>, vector<16x128xf32>
    %c0_1 = arith.constant 0 : index
    %c0_2 = arith.constant 0 : index
    %1 = vector.load %arg3[%c0_1, %c0_2] : memref<128x128xf32, #tpu.memory_space<vmem>>, vector<128x128xf32>
    %cst = arith.constant dense<0.000000e+00> : vector<16x128xf32>
    %2 = tpu.matmul %0, %1, %cst {dimension_numbers = #tpu.dot_dimension_numbers<[1], [0], [0], [1], [0, 0, 1, 1], [], []>} : vector<16x128xf32>, vector<128x128xf32>, vector<16x128xf32> -> vector<16x128xf32>
    %c128_i32 = arith.constant 128 : i32
    %3 = arith.muli %arg0, %c128_i32 : i32
    %4 = tpu.assume_multiple %3, 128 : i32
    %c0_3 = arith.constant 0 : index
    %5 = arith.index_cast %4 : i32 to index
    %6 = vector.load %arg2[%c0_3, %5] : memref<16x128xf32, #tpu.memory_space<vmem>>, vector<16x128xf32>
    %c0_4 = arith.constant 0 : index
    %c0_5 = arith.constant 0 : index
    %7 = vector.load %arg4[%c0_4, %c0_5] : memref<1x128xf32, #tpu.memory_space<vmem>>, vector<1x128xf32>
    %8 = vector.broadcast %7 : vector<1x128xf32> to vector<16x128xf32>
    %9 = arith.addf %2, %8 : vector<16x128xf32>
    %10 = arith.addf %9, %6 : vector<16x128xf32>
    %c0_6 = arith.constant 0 : index
    %c0_7 = arith.constant 0 : index
    %11 = vector.load %arg5[%c0_6, %c0_7] : memref<16x128xf32, #tpu.memory_space<vmem>>, vector<16x128xf32>
    tpu.vector_store %arg5[%c0_6, %c0_7], %10 {strides = array<i32>} : memref<16x128xf32, #tpu.memory_space<vmem>>, vector<16x128xf32>,
    return
  }
  func.func @transform_0(%arg0: i32, %arg1: i32) -> (i32, i32) {
    %c0_i32 = arith.constant 0 : i32
    %c0_i32_0 = arith.constant 0 : i32
    return %arg1, %c0_i32 : i32, i32
  }
  func.func @transform_1(%arg0: i32, %arg1: i32) -> (i32, i32) {
    %c0_i32 = arith.constant 0 : i32
    %c0_i32_0 = arith.constant 0 : i32
    return %c0_i32, %arg0 : i32, i32
  }
  func.func @transform_2(%arg0: i32, %arg1: i32) -> (i32, i32) {
    %c0_i32 = arith.constant 0 : i32
    %c0_i32_0 = arith.constant 0 : i32
    return %c0_i32, %arg0 : i32, i32
  }
  func.func @transform_3(%arg0: i32, %arg1: i32) -> (i32, i32) {
    %c0_i32 = arith.constant 0 : i32
    return %arg1, %arg0 : i32, i32
  }
}

</mosaic_0001>

<llo_original>
// kernel: tpu_custom_call.1
$region0: #{tpu_custom_call.1}
  #allocation0 [shape = 'u32[]', space=smem, size = 0x4, offset = 0x4, fixed_abs, tag = 'smem constant byte address 0x4 - core index']
  #allocation1 [shape = 'u32[144,128]{1,0:T(1,128)}', space=vmem, size = 0x12000, scoped, tag = 'internal scratch']
  %s0 = inlined_call_operand.hbm [shape: f32[16,128], index: 0, kind: input, shape index: {}]
  %s1 = inlined_call_operand.hbm [shape: f32[128,128], index: 1, kind: input, shape index: {}]
  %s2 = inlined_call_operand.vmem [shape: f32[1,128], index: 2, kind: input, shape index: {}]
  %s3 = inlined_call_operand.hbm [shape: f32[16,128], index: 3, kind: output, shape index: {}]
  %s4 = sld [smem:[#allocation0]]
  $region30: #{tpu_custom_call.1} parent=0
    _
  %s6 = ssub.s32 1, %s4
  %s7 = scalar_select 0, %s6, %s4
  $region1: #{tpu_custom_call.1} parent=0
    #allocation2 [shape = 'u8[8192]{0}', space=vmem, size = 0x2000, scoped, tag = 'input window, operand 0, single buffered']
    #allocation3 [shape = 's32[1]{0}', space=sflag, size = 0x4, scoped, tag = 'scoped memory for tpu_custom_call.1']
    #allocation4 [shape = 's32[1]{0}', space=sflag, size = 0x4, scoped, tag = 'scoped memory for tpu_custom_call.1']
    #allocation5 [shape = 'u8[65536]{0}', space=vmem, size = 0x10000, scoped, tag = 'input window, operand 1, single buffered']
    #allocation6 [shape = 's32[1]{0}', space=sflag, size = 0x4, scoped, tag = 'scoped memory for tpu_custom_call.1']
    #allocation7 [shape = 'u8[8192]{0}', space=vmem, size = 0x2000, scoped, tag = 'output window, operand 0, single buffered']
    %8 = vsyncpa [#allocation3], 0
    %9 = vsyncpa [#allocation6], 0
    %10 = vsyncpa [#allocation4], 0
    // Predicated region
    $region2: #{tpu_custom_call.1} parent=1 // pred_check
      _
    $region3: #{tpu_custom_call.1} parent=1 // pred_check_branch
      %12 = sbr.rel (0) target = $region5
    $region4: #{tpu_custom_call.1} parent=1 // pred_region
      %s14 = ssub.s32 256, 256
      %15 = vsyncadd [#allocation3], %s14
      %s16 = sshll.u32 [#allocation2], 4
      %s17 = int_to_ptr.vmem [resolvable:$true] %s16
      %22 = dma.hbm_to_vmem [thread:$0]  %s0, 256, %s17, [#allocation3], 128, 128, 8
    $region5: #{tpu_custom_call.1} parent=1 // pred_fallthru
      _
    // Predicated region
    $region6: #{tpu_custom_call.1} parent=1 // pred_check
      _
    $region7: #{tpu_custom_call.1} parent=1 // pred_check_branch
      %24 = sbr.rel (0) target = $region9
    $region8: #{tpu_custom_call.1} parent=1 // pred_region
      %s26 = ssub.s32 2048, 2048
      %27 = vsyncadd [#allocation6], %s26
      %s28 = sshll.u32 [#allocation5], 4
      %s29 = int_to_ptr.vmem [resolvable:$true] %s28
      %34 = dma.hbm_to_vmem [thread:$0]  %s1, 2048, %s29, [#allocation6], 128, 128, 8
    $region9: #{tpu_custom_call.1} parent=1 // pred_fallthru
      _
    // Predicated region
    $region10: #{tpu_custom_call.1} parent=1 // pred_check
      _
    $region11: #{tpu_custom_call.1} parent=1 // pred_check_branch
      %36 = sbr.rel (0) target = $region13
    $region12: #{tpu_custom_call.1} parent=1 // pred_region
      _
    $region13: #{tpu_custom_call.1} parent=1 // pred_fallthru
      _
    // Predicated region
    $region14: #{tpu_custom_call.1} parent=1 // pred_check
      _
    $region15: #{tpu_custom_call.1} parent=1 // pred_check_branch
      %38 = sbr.rel (0) target = $region17
    $region16: #{tpu_custom_call.1} parent=1 // pred_region
      %39 = dma.done [#allocation3], 256
    $region17: #{tpu_custom_call.1} parent=1 // pred_fallthru
      _
    // Predicated region
    $region18: #{tpu_custom_call.1} parent=1 // pred_check
      _
    $region19: #{tpu_custom_call.1} parent=1 // pred_check_branch
      %41 = sbr.rel (0) target = $region21
    $region20: #{tpu_custom_call.1} parent=1 // pred_region
      %42 = dma.done [#allocation6], 2048
    $region21: #{tpu_custom_call.1} parent=1 // pred_fallthru
      _
    %v43 = vld [vmem:[#allocation2] sm:$0xff]
    %v44 = vld [vmem:[#allocation2 + $0x8] sm:$0xff]
    %v45 = vld [vmem:[#allocation5] sm:$0xff]
    %v46 = vld [vmem:[#allocation5 + $0x8] sm:$0xff]
    %v47 = vld [vmem:[#allocation5 + $0x10] sm:$0xff]
    %v48 = vld [vmem:[#allocation5 + $0x18] sm:$0xff]
    %v49 = vld [vmem:[#allocation5 + $0x20] sm:$0xff]
    %v50 = vld [vmem:[#allocation5 + $0x28] sm:$0xff]
    %v51 = vld [vmem:[#allocation5 + $0x30] sm:$0xff]
    %v52 = vld [vmem:[#allocation5 + $0x38] sm:$0xff]
    %v53 = vld [vmem:[#allocation5 + $0x40] sm:$0xff]
    %v54 = vld [vmem:[#allocation5 + $0x48] sm:$0xff]
    %v55 = vld [vmem:[#allocation5 + $0x50] sm:$0xff]
    %v56 = vld [vmem:[#allocation5 + $0x58] sm:$0xff]
    %v57 = vld [vmem:[#allocation5 + $0x60] sm:$0xff]
    %v58 = vld [vmem:[#allocation5 + $0x68] sm:$0xff]
    %v59 = vld [vmem:[#allocation5 + $0x70] sm:$0xff]
    %v60 = vld [vmem:[#allocation5 + $0x78] sm:$0xff]
    %s61 = smul.u32 0, 128
    %s62 = sshra.s32 %s61, 7
    %s63 = sand.u32 %s61, 127
    %s64 = scalar_lea.vmem [#allocation2], %s62
    %v65 = vld [vmem:[%s64] sm:$0xff]
    %v66 = vld [vmem:[%s64 + $0x8] sm:$0xff]
    %v67 = vld [vmem:[%s2] sm:$0x1]
    %v69 = vlaneseq
    %v70 = vshrl.u32 %v69, 7
    %v71 = vsub.s32 0, %v70
    %v72 = vrot.slane %v67, %v71
    %74 = vmatprep.subr.mxu0 0.0
    %75 = vmatpush1.msra.mxu0 %v45
    %76 = vmatprep.subr.mxu0 0.0
    %77 = vmatpush1.msra.mxu0 %v46
    %78 = vmatprep.subr.mxu0 0.0
    %79 = vmatpush1.msra.mxu0 %v47
    %80 = vmatprep.subr.mxu0 0.0
    %81 = vmatpush1.msra.mxu0 %v48
    %82 = vmatprep.subr.mxu0 0.0
    %83 = vmatpush1.msra.mxu0 %v49
    %84 = vmatprep.subr.mxu0 0.0
    %85 = vmatpush1.msra.mxu0 %v50
    %86 = vmatprep.subr.mxu0 0.0
    %87 = vmatpush1.msra.mxu0 %v51
    %88 = vmatprep.subr.mxu0 0.0
    %89 = vmatpush1.msra.mxu0 %v52
    %90 = vmatprep.subr.mxu0 0.0
    %91 = vmatpush1.msra.mxu0 %v53
    %92 = vmatprep.subr.mxu0 0.0
    %93 = vmatpush1.msra.mxu0 %v54
    %94 = vmatprep.subr.mxu0 0.0
    %95 = vmatpush1.msra.mxu0 %v55
    %96 = vmatprep.subr.mxu0 0.0
    %97 = vmatpush1.msra.mxu0 %v56
    %98 = vmatprep.subr.mxu0 0.0
    %99 = vmatpush1.msra.mxu0 %v57
    %100 = vmatprep.subr.mxu0 0.0
    %101 = vmatpush1.msra.mxu0 %v58
    %102 = vmatprep.subr.mxu0 0.0
    %103 = vmatpush1.msra.mxu0 %v59
    %104 = vmatprep.subr.mxu0 0.0
    %105 = vmatpush1.msra.mxu0 %v60
    %106 = vmatprep.subr.mxu0 0.0
    %107 = vmatpush1.msra.mxu0 0.0
    %108 = vmatprep.subr.mxu0 0.0
    %109 = vmatpush1.msra.mxu0 0.0
    %110 = vmatprep.subr.mxu0 0.0
    %111 = vmatpush1.msra.mxu0 0.0
    %112 = vmatprep.subr.mxu0 0.0
    %113 = vmatpush1.msra.mxu0 0.0
    %114 = vmatprep.subr.mxu0 0.0
    %115 = vmatpush1.msra.mxu0 0.0
    %116 = vmatprep.subr.mxu0 0.0
    %117 = vmatpush1.msra.mxu0 0.0
    %118 = vmatprep.subr.mxu0 0.0
    %119 = vmatpush1.msra.mxu0 0.0
    %120 = vmatprep.subr.mxu0 0.0
    %121 = vmatpush1.msra.mxu0 0.0
    %122 = vmatprep.subr.mxu0 0.0
    %123 = vmatpush1.msra.mxu0 0.0
    %124 = vmatprep.subr.mxu0 0.0
    %125 = vmatpush1.msra.mxu0 0.0
    %126 = vmatprep.subr.mxu0 0.0
    %127 = vmatpush1.msra.mxu0 0.0
    %128 = vmatprep.subr.mxu0 0.0
    %129 = vmatpush1.msra.mxu0 0.0
    %130 = vmatprep.subr.mxu0 0.0
    %131 = vmatpush1.msra.mxu0 0.0
    %132 = vmatprep.subr.mxu0 0.0
    %133 = vmatpush1.msra.mxu0 0.0
    %134 = vmatprep.subr.mxu0 0.0
    %135 = vmatpush1.msra.mxu0 0.0
    %136 = vmatprep.subr.mxu0 0.0
    %137 = vmatpush1.msra.mxu0 0.0
    %138 = vmatprep.mubr.f32.mxu0 0.0
    %139 = vmatmul.mubr.f32.gmra.mrb[0].mxu0 %v43
    %v140 = vpop.f32.mrb[0].mxu0
    %v141 = vadd.f32 %v72, %v140
    %v142 = vpop.f32.mrb[0].mxu0
    %143 = vmatprep.mubr.f32.mxu0 0.0
    %144 = vmatmul.mubr.f32.gmra.mrb[0].mxu0 %v44
    %v145 = vpop.f32.mrb[0].mxu0
    %v146 = vadd.f32 %v72, %v145
    %v147 = vpop.f32.mrb[0].mxu0
    %148 = vdwg.mxu0
    %v149 = vadd.f32 %v141, %v65
    %v150 = vadd.f32 %v146, %v66
    %151 = vst [vmem:[#allocation7] sm:$0xff] %v149
    %152 = vst [vmem:[#allocation7 + $0x8] sm:$0xff] %v150
    // Predicated region
    $region22: #{tpu_custom_call.1} parent=1 // pred_check
      _
    $region23: #{tpu_custom_call.1} parent=1 // pred_check_branch
      %154 = sbr.rel (0) target = $region25
    $region24: #{tpu_custom_call.1} parent=1 // pred_region
      %s156 = ssub.s32 256, 256
      %157 = vsyncadd [#allocation4], %s156
      %s158 = sshll.u32 [#allocation7], 4
      %s159 = int_to_ptr.vmem [resolvable:$true] %s158
      %164 = dma.vmem_to_hbm [thread:$0]  %s159, 256, %s3, [#allocation4], 128, 128, 8
    $region25: #{tpu_custom_call.1} parent=1 // pred_fallthru
      _
    // Predicated region
    $region26: #{tpu_custom_call.1} parent=1 // pred_check
      _
    $region27: #{tpu_custom_call.1} parent=1 // pred_check_branch
      %166 = sbr.rel (0) target = $region29
    $region28: #{tpu_custom_call.1} parent=1 // pred_region
      %167 = dma.done [#allocation4], 256
    $region29: #{tpu_custom_call.1} parent=1 // pred_fallthru
      _
    %168 = vsyncpa [#allocation3], 1
    %169 = vsyncpa [#allocation6], 1
    %170 = vsyncpa [#allocation4], 1

</llo_original>
